<compile_context>
chip_gen: v6e
topology: v6e:2x2x1
jax: 0.10.0
libtpu: 0.0.40
codegen_flags: <defaults>
</compile_context>

<pallas_src>
import math

import jax
import jax.numpy as jnp
from jax.experimental import pallas as pl
from jax.experimental.pallas import tpu as pltpu


def _round_up(x, m):
    return ((x + m - 1) // m) * m


def _cosine_head_kernel(x_ref, w_ref, inx_ref, inw_ref, o_ref):
    # x_ref: (TM, D), w_ref: (TN, D) already in the compute dtype (bf16 by default).
    # Contract both operands on their last (lane) dim -> MXU, no transpose traffic.
    raw = jax.lax.dot_general(
        x_ref[...], w_ref[...],
        dimension_numbers=(((1,), (1,)), ((), ())),
        preferred_element_type=jnp.float32)            # (TM, TN) f32 accumulation
    # logits = raw * (scale/||x||) * (1/||w||); scale is pre-folded into inx_ref.
    o_ref[...] = (raw * inx_ref[...] * inw_ref[...]).astype(o_ref.dtype)


def softmax_head_forward(x, weight, label=None, *, scale=64.0, tm=256, tn=256,
                         compute_dtype=jnp.bfloat16, out_dtype=jnp.float32):
    """x: (B, in_features), weight: (out_features, in_features).
    Returns (B, out_features) logits = scale * cosine(x, weight).
    `label` is accepted for API parity with the PyTorch module but unused."""
    del label  # unused in the device_id=None forward path of the reference module
    B, D = x.shape
    C, D2 = weight.shape
    assert D == D2

    x32 = x.astype(jnp.float32)
    w32 = weight.astype(jnp.float32)

    # Hoisted L2-normalization reciprocals (F.normalize: v / max(||v||_2, 1e-12)).
    # scale is folded into the x-side reciprocal.
    inv_nx = scale / jnp.maximum(
        jnp.sqrt(jnp.sum(x32 * x32, axis=1, keepdims=True)), 1e-12)            # (B, 1)
    inv_nw = 1.0 / jnp.maximum(
        jnp.sqrt(jnp.sum(w32 * w32, axis=1, keepdims=True)), 1e-12)            # (C, 1)
    inv_nw = inv_nw.reshape(1, C)                                              # (1, C)

    # Cast operands to the MXU compute dtype in the wrapper (single fused pass over the
    # weight together with the norm reduction above).
    cdt = jnp.dtype(jnp.float32) if compute_dtype is None else jnp.dtype(compute_dtype)
    xk = x32.astype(cdt)
    wk = w32.astype(cdt)

    # Tile sizes: sublane-aligned batch tiles, lane-dense (>=128-wide) class tiles.
    TM = min(tm, _round_up(B, 8))
    TN = min(tn, _round_up(C, 128))

    # Keep >= 2 blocks on one "parallel" axis when possible so v7x's 2 TCs both get work.
    if pl.cdiv(B, TM) == 1 and pl.cdiv(C, TN) == 1 and C > 128:
        TN = _round_up(pl.cdiv(C, 2), 128)

    # VMEM budget: double-buffered operand + output tiles must fit under v7x's 64 MiB
    # (v5e/v6e have 128 MiB physical, so v7x is the binding case).
    out_isize = jnp.dtype(out_dtype).itemsize

    def _vmem_bytes(tm_, tn_):
        return (2 * (tm_ + tn_) * D * cdt.itemsize      # x + weight tiles, double-buffered
                + 2 * tm_ * tn_ * out_isize             # output tile, double-buffered
                + 2 * (tm_ + tn_) * 4)                  # norm-reciprocal tiles

    budget = 40 * 1024 * 1024
    while _vmem_bytes(TM, TN) > budget and TN > 128:
        TN = max(128, _round_up(TN // 2, 128))
    while _vmem_bytes(TM, TN) > budget and TM > 8:
        TM = max(8, _round_up(TM // 2, 8))

    # Grid: class (weight) axis OUTER, batch axis INNER -> the big (C, D) weight tile is
    # fetched once per class tile and stays resident in VMEM across the inner batch loop.
    grid = (pl.cdiv(C, TN), pl.cdiv(B, TM))

    out = pl.pallas_call(
        _cosine_head_kernel,
        out_shape=jax.ShapeDtypeStruct((B, C), out_dtype),
        grid_spec=pltpu.PrefetchScalarGridSpec(
            num_scalar_prefetch=0,
            grid=grid,
            in_specs=[
                pl.BlockSpec((TM, D), lambda i, j: (j, 0)),   # x tile (inner-varying, small)
                pl.BlockSpec((TN, D), lambda i, j: (i, 0)),   # weight tile (outer, resident)
                pl.BlockSpec((TM, 1), lambda i, j: (j, 0)),   # scale/||x|| per row
                pl.BlockSpec((1, TN), lambda i, j: (0, i)),   # 1/||w|| per class
            ],
            out_specs=pl.BlockSpec((TM, TN), lambda i, j: (j, i)),
        ),
        compiler_params=pltpu.CompilerParams(
            dimension_semantics=("parallel", "parallel"),
            vmem_limit_bytes=48 * 1024 * 1024),
    )(xk, wk, inv_nx, inv_nw)

    return out


def _reference(x, weight, scale=64.0):
    xn = x / jnp.maximum(jnp.linalg.norm(x, axis=1, keepdims=True), 1e-12)
    wn = weight / jnp.maximum(jnp.linalg.norm(weight, axis=1, keepdims=True), 1e-12)
    return (xn @ wn.T) * scale


if __name__ == "__main__":
    key = jax.random.PRNGKey(0)

    # --- Small shapes consistent with the module: batch=8, in_features=32, classes=16 ---
    B, IN_F, OUT_F = 8, 32, 16
    kx, kw, kl, kx2, kw2 = jax.random.split(key, 5)

    x = jax.random.normal(kx, (B, IN_F), dtype=jnp.float32)
    # Deterministic Xavier-uniform init of weight (out_features, in_features); bias is zeros
    # and unused in the device_id=None forward path.
    bound = math.sqrt(6.0 / (IN_F + OUT_F))
    weight = jax.random.uniform(kw, (OUT_F, IN_F), dtype=jnp.float32,
                                minval=-bound, maxval=bound)
    label = jax.random.randint(kl, (B,), 0, OUT_F, dtype=jnp.int32)  # unused by forward

    ref = _reference(x, weight)

    # f32 MXU path: tight check against the reference.
    out_f32 = softmax_head_forward(x, weight, label, compute_dtype=jnp.float32)
    jax.block_until_ready(out_f32)
    assert out_f32.shape == (B, OUT_F)
    assert jnp.allclose(out_f32, ref, atol=1e-4, rtol=1e-4), "f32 mismatch vs reference"

    # Default bf16 MXU path (f32 accumulation): relaxed tolerance on scale-64 logits.
    out_bf16 = softmax_head_forward(x, weight, label)
    jax.block_until_ready(out_bf16)
    assert out_bf16.shape == (B, OUT_F)
    assert jnp.allclose(out_bf16, ref, atol=2.0), "bf16 default path diverged too far"

    # --- Multi-tile exercise: grid (2,1), ragged class edge (384 % 256 != 0), no padding ---
    B2, D2, C2 = 64, 128, 384
    x2 = jax.random.normal(kx2, (B2, D2), dtype=jnp.float32)
    w2 = jax.random.normal(kw2, (C2, D2), dtype=jnp.float32) * 0.05
    ref2 = _reference(x2, w2)

    out2_f32 = softmax_head_forward(x2, w2, compute_dtype=jnp.float32)
    jax.block_until_ready(out2_f32)
    assert out2_f32.shape == (B2, C2)
    assert jnp.allclose(out2_f32, ref2, atol=1e-3, rtol=1e-3), "tiled f32 mismatch"

    out2_bf16 = softmax_head_forward(x2, w2)
    jax.block_until_ready(out2_bf16)
    assert jnp.allclose(out2_bf16, ref2, atol=2.0), "tiled bf16 path diverged too far"

    # --- Ragged batch edge (B not multiple of 8-aligned tile) + bf16 output writeback ---
    B3 = 10
    x3 = jax.random.normal(kx, (B3, D2), dtype=jnp.float32)
    ref3 = _reference(x3, w2)
    out3 = softmax_head_forward(x3, w2, compute_dtype=jnp.float32, out_dtype=jnp.bfloat16)
    jax.block_until_ready(out3)
    assert out3.dtype == jnp.bfloat16 and out3.shape == (B3, C2)
    assert jnp.allclose(out3.astype(jnp.float32), ref3, atol=0.5), "bf16-output mismatch"

    print("KERNEL_OK")
</pallas_src>

<mosaic_0001>
module attributes {stable_mosaic.version = 11 : i64} {
  func.func @_cosine_head_kernel(%arg0: i32, %arg1: i32, %arg2: memref<8x32xf32, #tpu.memory_space<vmem>>, %arg3: memref<128x32xf32, #tpu.memory_space<vmem>>, %arg4: memref<8x1xf32, #tpu.memory_space<vmem>>, %arg5: memref<1x128xf32, #tpu.memory_space<vmem>>, %arg6: memref<8x128xf32, #tpu.memory_space<vmem>>) attributes {dimension_semantics = [#tpu.dimension_semantics<parallel>, #tpu.dimension_semantics<parallel>], iteration_bounds = array<i64: 1, 1>, scalar_prefetch = 0 : i64, scratch_operands = 0 : i64, tpu.core_type = #tpu.core_type<tc>, window_params = [{transform_indices = @transform_0, window_bounds = array<i64: 8, 32>}, {transform_indices = @transform_1, window_bounds = array<i64: 128, 32>}, {transform_indices = @transform_2, window_bounds = array<i64: 8, 1>}, {transform_indices = @transform_3, window_bounds = array<i64: 1, 128>}, {transform_indices = @transform_4, window_bounds = array<i64: 8, 128>}]} {
    %c0 = arith.constant 0 : index
    %c0_0 = arith.constant 0 : index
    %0 = vector.load %arg2[%c0, %c0_0] : memref<8x32xf32, #tpu.memory_space<vmem>>, vector<8x32xf32>
    %c0_1 = arith.constant 0 : index
    %c0_2 = arith.constant 0 : index
    %1 = vector.load %arg3[%c0_1, %c0_2] : memref<128x32xf32, #tpu.memory_space<vmem>>, vector<128x32xf32>
    %cst = arith.constant dense<0.000000e+00> : vector<8x128xf32>
    %2 = tpu.matmul %0, %1, %cst {dimension_numbers = #tpu.dot_dimension_numbers<[1], [1], [0], [0], [0, 0, 1, 0], [], []>} : vector<8x32xf32>, vector<128x32xf32>, vector<8x128xf32> -> vector<8x128xf32>
    %c0_3 = arith.constant 0 : index
    %c0_4 = arith.constant 0 : index
    %3 = vector.load %arg4[%c0_3, %c0_4] : memref<8x1xf32, #tpu.memory_space<vmem>>, vector<8x1xf32>
    %4 = vector.broadcast %3 : vector<8x1xf32> to vector<8x128xf32>
    %5 = arith.mulf %2, %4 : vector<8x128xf32>
    %c0_5 = arith.constant 0 : index
    %c0_6 = arith.constant 0 : index
    %6 = vector.load %arg5[%c0_5, %c0_6] : memref<1x128xf32, #tpu.memory_space<vmem>>, vector<1x128xf32>
    %7 = vector.broadcast %6 : vector<1x128xf32> to vector<8x128xf32>
    %8 = arith.mulf %5, %7 : vector<8x128xf32>
    %c0_7 = arith.constant 0 : index
    %c0_8 = arith.constant 0 : index
    %9 = vector.load %arg6[%c0_7, %c0_8] : memref<8x128xf32, #tpu.memory_space<vmem>>, vector<8x128xf32>
    tpu.vector_store %arg6[%c0_7, %c0_8], %8 {strides = array<i32>} : memref<8x128xf32, #tpu.memory_space<vmem>>, vector<8x128xf32>,
    return
  }
  func.func @transform_0(%arg0: i32, %arg1: i32) -> (i32, i32) {
    %c0_i32 = arith.constant 0 : i32
    %c0_i32_0 = arith.constant 0 : i32
    return %arg1, %c0_i32 : i32, i32
  }
  func.func @transform_1(%arg0: i32, %arg1: i32) -> (i32, i32) {
    %c0_i32 = arith.constant 0 : i32
    %c0_i32_0 = arith.constant 0 : i32
    return %arg0, %c0_i32 : i32, i32
  }
  func.func @transform_2(%arg0: i32, %arg1: i32) -> (i32, i32) {
    %c0_i32 = arith.constant 0 : i32
    %c0_i32_0 = arith.constant 0 : i32
    return %arg1, %c0_i32 : i32, i32
  }
  func.func @transform_3(%arg0: i32, %arg1: i32) -> (i32, i32) {
    %c0_i32 = arith.constant 0 : i32
    %c0_i32_0 = arith.constant 0 : i32
    return %c0_i32, %arg0 : i32, i32
  }
  func.func @transform_4(%arg0: i32, %arg1: i32) -> (i32, i32) {
    %c0_i32 = arith.constant 0 : i32
    return %arg1, %arg0 : i32, i32
  }
}

</mosaic_0001>

<llo_original>
// kernel: tpu_custom_call.1
$region0: #{tpu_custom_call.1}
  #allocation0 [shape = 'u32[]', space=smem, size = 0x4, offset = 0x4, fixed_abs, tag = 'smem constant byte address 0x4 - core index']
  #allocation1 [shape = 'u32[144,128]{1,0:T(1,128)}', space=vmem, size = 0x12000, scoped, tag = 'internal scratch']
  %s0 = inlined_call_operand.vmem [shape: f32[8,32], index: 0, kind: input, shape index: {}]
  %s1 = inlined_call_operand.hbm [shape: f32[16,32], index: 1, kind: input, shape index: {}]
  %s2 = inlined_call_operand.vmem [shape: f32[8,1], index: 2, kind: input, shape index: {}]
  %s3 = inlined_call_operand.vmem [shape: f32[1,16], index: 3, kind: input, shape index: {}]
  %s4 = inlined_call_operand.hbm [shape: f32[8,16], index: 4, kind: output, shape index: {}]
  %s5 = sld [smem:[#allocation0]]
  $region30: #{tpu_custom_call.1} parent=0
    _
  %s7 = ssub.s32 1, %s5
  %s8 = scalar_select 0, %s7, %s5
  $region1: #{tpu_custom_call.1} parent=0
    #allocation2 [shape = 'u8[65536]{0}', space=vmem, size = 0x10000, scoped, tag = 'input window, operand 1, single buffered']
    #allocation3 [shape = 's32[1]{0}', space=sflag, size = 0x4, scoped, tag = 'scoped memory for tpu_custom_call.1']
    #allocation4 [shape = 's32[1]{0}', space=sflag, size = 0x4, scoped, tag = 'scoped memory for tpu_custom_call.1']
    #allocation5 [shape = 'u8[4096]{0}', space=vmem, size = 0x1000, scoped, tag = 'output window, operand 0, single buffered']
    %9 = vsyncpa [#allocation3], 0
    %10 = vsyncpa [#allocation4], 0
    // Predicated region
    $region2: #{tpu_custom_call.1} parent=1 // pred_check
      _
    $region3: #{tpu_custom_call.1} parent=1 // pred_check_branch
      %12 = sbr.rel (0) target = $region5
    $region4: #{tpu_custom_call.1} parent=1 // pred_region
      _
    $region5: #{tpu_custom_call.1} parent=1 // pred_fallthru
      _
    // Predicated region
    $region6: #{tpu_custom_call.1} parent=1 // pred_check
      _
    $region7: #{tpu_custom_call.1} parent=1 // pred_check_branch
      %14 = sbr.rel (0) target = $region9
    $region8: #{tpu_custom_call.1} parent=1 // pred_region
      %s16 = ssub.s32 2048, 256
      %17 = vsyncadd [#allocation3], %s16
      %s18 = sshll.u32 [#allocation2], 4
      %s19 = int_to_ptr.vmem [resolvable:$true] %s18
      %24 = dma.hbm_to_vmem [thread:$0]  %s1, 256, %s19, [#allocation3], 128, 128, 8
    $region9: #{tpu_custom_call.1} parent=1 // pred_fallthru
      _
    // Predicated region
    $region10: #{tpu_custom_call.1} parent=1 // pred_check
      _
    $region11: #{tpu_custom_call.1} parent=1 // pred_check_branch
      %26 = sbr.rel (0) target = $region13
    $region12: #{tpu_custom_call.1} parent=1 // pred_region
      _
    $region13: #{tpu_custom_call.1} parent=1 // pred_fallthru
      _
    // Predicated region
    $region14: #{tpu_custom_call.1} parent=1 // pred_check
      _
    $region15: #{tpu_custom_call.1} parent=1 // pred_check_branch
      %28 = sbr.rel (0) target = $region17
    $region16: #{tpu_custom_call.1} parent=1 // pred_region
      _
    $region17: #{tpu_custom_call.1} parent=1 // pred_fallthru
      _
    // Predicated region
    $region18: #{tpu_custom_call.1} parent=1 // pred_check
      _
    $region19: #{tpu_custom_call.1} parent=1 // pred_check_branch
      %30 = sbr.rel (0) target = $region21
    $region20: #{tpu_custom_call.1} parent=1 // pred_region
      %31 = dma.done [#allocation3], 2048
    $region21: #{tpu_custom_call.1} parent=1 // pred_fallthru
      _
    %v32 = vld [vmem:[%s0] sm:$0xff]
    %v33 = vld [vmem:[#allocation2] sm:$0xff]
    %v34 = vld [vmem:[#allocation2 + $0x8] sm:$0xff]
    %v35 = vld [vmem:[#allocation2 + $0x10] sm:$0xff]
    %v36 = vld [vmem:[#allocation2 + $0x18] sm:$0xff]
    %v37 = vld [vmem:[#allocation2 + $0x20] sm:$0xff]
    %v38 = vld [vmem:[#allocation2 + $0x28] sm:$0xff]
    %v39 = vld [vmem:[#allocation2 + $0x30] sm:$0xff]
    %v40 = vld [vmem:[#allocation2 + $0x38] sm:$0xff]
    %v41 = vld [vmem:[#allocation2 + $0x40] sm:$0xff]
    %v42 = vld [vmem:[#allocation2 + $0x48] sm:$0xff]
    %v43 = vld [vmem:[#allocation2 + $0x50] sm:$0xff]
    %v44 = vld [vmem:[#allocation2 + $0x58] sm:$0xff]
    %v45 = vld [vmem:[#allocation2 + $0x60] sm:$0xff]
    %v46 = vld [vmem:[#allocation2 + $0x68] sm:$0xff]
    %v47 = vld [vmem:[#allocation2 + $0x70] sm:$0xff]
    %v48 = vld [vmem:[#allocation2 + $0x78] sm:$0xff]
    %vm49 = vcmask 261120
    %v51 = vsel %vm49, %v32, 0
    %v54 = vsel %vm49, %v33, 0
    %v57 = vsel %vm49, %v34, 0
    %v60 = vsel %vm49, %v35, 0
    %v63 = vsel %vm49, %v36, 0
    %v66 = vsel %vm49, %v37, 0
    %v69 = vsel %vm49, %v38, 0
    %v72 = vsel %vm49, %v39, 0
    %v75 = vsel %vm49, %v40, 0
    %v78 = vsel %vm49, %v41, 0
    %v81 = vsel %vm49, %v42, 0
    %v84 = vsel %vm49, %v43, 0
    %v87 = vsel %vm49, %v44, 0
    %v90 = vsel %vm49, %v45, 0
    %v93 = vsel %vm49, %v46, 0
    %v96 = vsel %vm49, %v47, 0
    %v99 = vsel %vm49, %v48, 0
    %101 = vmatprep.subr.mxu0 0.0
    %102 = vmatpush1.xpose.msra.mxu0 %v99
    %103 = vmatprep.subr.mxu0 0.0
    %104 = vmatpush1.xpose.msra.mxu0 %v96
    %105 = vmatprep.subr.mxu0 0.0
    %106 = vmatpush1.xpose.msra.mxu0 %v93
    %107 = vmatprep.subr.mxu0 0.0
    %108 = vmatpush1.xpose.msra.mxu0 %v90
    %109 = vmatprep.subr.mxu0 0.0
    %110 = vmatpush1.xpose.msra.mxu0 %v87
    %111 = vmatprep.subr.mxu0 0.0
    %112 = vmatpush1.xpose.msra.mxu0 %v84
    %113 = vmatprep.subr.mxu0 0.0
    %114 = vmatpush1.xpose.msra.mxu0 %v81
    %115 = vmatprep.subr.mxu0 0.0
    %116 = vmatpush1.xpose.msra.mxu0 %v78
    %117 = vmatprep.subr.mxu0 0.0
    %118 = vmatpush1.xpose.msra.mxu0 %v75
    %119 = vmatprep.subr.mxu0 0.0
    %120 = vmatpush1.xpose.msra.mxu0 %v72
    %121 = vmatprep.subr.mxu0 0.0
    %122 = vmatpush1.xpose.msra.mxu0 %v69
    %123 = vmatprep.subr.mxu0 0.0
    %124 = vmatpush1.xpose.msra.mxu0 %v66
    %125 = vmatprep.subr.mxu0 0.0
    %126 = vmatpush1.xpose.msra.mxu0 %v63
    %127 = vmatprep.subr.mxu0 0.0
    %128 = vmatpush1.xpose.msra.mxu0 %v60
    %129 = vmatprep.subr.mxu0 0.0
    %130 = vmatpush1.xpose.msra.mxu0 %v57
    %131 = vmatprep.subr.mxu0 0.0
    %132 = vmatpush1.xpose.msra.mxu0 %v54
    %133 = vmatprep.subr.mxu0 0.0
    %134 = vmatpush2.xpose.msra.mxu0 0.0
    %135 = vmatprep.subr.mxu0 0.0
    %136 = vmatpush2.xpose.msra.mxu0 0.0
    %137 = vmatprep.subr.mxu0 0.0
    %138 = vmatpush2.xpose.msra.mxu0 0.0
    %139 = vmatprep.subr.mxu0 0.0
    %140 = vmatpush2.xpose.msra.mxu0 0.0
    %141 = vmatprep.subr.mxu0 0.0
    %142 = vmatpush2.xpose.msra.mxu0 0.0
    %143 = vmatprep.subr.mxu0 0.0
    %144 = vmatpush2.xpose.msra.mxu0 0.0
    %145 = vmatprep.subr.mxu0 0.0
    %146 = vmatpush2.xpose.msra.mxu0 0.0
    %147 = vmatprep.subr.mxu0 0.0
    %148 = vmatpush2.xpose.msra.mxu0 0.0
    %149 = vmatprep.subr.mxu0 0.0
    %150 = vmatpush2.xpose.msra.mxu0 0.0
    %151 = vmatprep.subr.mxu0 0.0
    %152 = vmatpush2.xpose.msra.mxu0 0.0
    %153 = vmatprep.subr.mxu0 0.0
    %154 = vmatpush2.xpose.msra.mxu0 0.0
    %155 = vmatprep.subr.mxu0 0.0
    %156 = vmatpush2.xpose.msra.mxu0 0.0
    %157 = vmatprep.subr.mxu0 0.0
    %158 = vmatpush2.xpose.msra.mxu0 0.0
    %159 = vmatprep.subr.mxu0 0.0
    %160 = vmatpush2.xpose.msra.mxu0 0.0
    %161 = vmatprep.subr.mxu0 0.0
    %162 = vmatpush2.xpose.msra.mxu0 0.0
    %163 = vmatprep.subr.mxu0 0.0
    %164 = vmatpush2.xpose.msra.mxu0 0.0
    %165 = vmatprep.mubr.f32.mxu0 0.0
    %166 = vmatmul.mubr.f32.gmra.mxu0 %v51
    %v167 = vpop.f32.mrf.mxu0
    %v168 = vadd.f32 0.0, %v167
    %v169 = vpop.f32.mrf.mxu0
    %170 = vdwg.mxu0
    %v171 = vld [vmem:[%s2] sm:$0xff]
    %173 = vset.pattern.permute.xlu0 0
    %174 = vperm.xlu0 %173, %v171
    %v175 = vpop.permute.xlu0 %174
    %v177 = vmul.f32 %v168, %v175
    %v178 = vld [vmem:[%s3] sm:$0x1]
    %v180 = vlaneseq
    %v181 = vshrl.u32 %v180, 7
    %v182 = vsub.s32 0, %v181
    %v183 = vrot.slane %v178, %v182
    %v185 = vmul.f32 %v177, %v183
    %186 = vst [vmem:[#allocation5] sm:$0xff] %v185
    // Predicated region
    $region22: #{tpu_custom_call.1} parent=1 // pred_check
      _
    $region23: #{tpu_custom_call.1} parent=1 // pred_check_branch
      %188 = sbr.rel (0) target = $region25
    $region24: #{tpu_custom_call.1} parent=1 // pred_region
      %s190 = ssub.s32 128, 128
      %191 = vsyncadd [#allocation4], %s190
      %s193 = sshll.u32 [#allocation5], 4
      %s194 = int_to_ptr.vmem [resolvable:$true] %s193
      %196 = dma.vmem_to_hbm [thread:$0]  %s194, 128, %s4, [#allocation4]
    $region25: #{tpu_custom_call.1} parent=1 // pred_fallthru
      _
    // Predicated region
    $region26: #{tpu_custom_call.1} parent=1 // pred_check
      _
    $region27: #{tpu_custom_call.1} parent=1 // pred_check_branch
      %198 = sbr.rel (0) target = $region29
    $region28: #{tpu_custom_call.1} parent=1 // pred_region
      %199 = dma.done [#allocation4], 128
    $region29: #{tpu_custom_call.1} parent=1 // pred_fallthru
      _
    %200 = vsyncpa [#allocation3], 1
    %201 = vsyncpa [#allocation4], 1

</llo_original>
